<compile_context>
chip_gen: v5e
topology: v5e:2x2
jax: 0.10.0
libtpu: 0.0.40
codegen_flags: <defaults>
</compile_context>

<pallas_src>
import jax
import jax.numpy as jnp
from jax.experimental import pallas as pl
from jax.experimental.pallas import tpu as pltpu


def _round_up(x, m):
    return ((x + m - 1) // m) * m


def _synergy_head_kernel(x_ref, w_ref, b_ref, o_ref, acc_ref):
    # x_ref: [tm, tk], w_ref: [tk, tn] (pre-transposed weight), b_ref: [1, tn] f32,
    # o_ref: [tm, tn], acc_ref: [tm, tn] f32 scratch (resident across the K axis).
    k = pl.program_id(2)

    @pl.when(k == 0)
    def _():
        acc_ref[...] = jnp.zeros_like(acc_ref)

    acc_ref[...] += jnp.dot(
        x_ref[...], w_ref[...], preferred_element_type=jnp.float32
    )

    @pl.when(k == pl.num_programs(2) - 1)
    def _():
        o_ref[...] = (acc_ref[...] + b_ref[...]).astype(o_ref.dtype)


def prepare_synergy_head_params(weight, bias, *, param_dtype=jnp.float32, tn_cap=512):
    """One-time (offline) parameter prep.

    weight: [C, D]  (PyTorch nn.Linear layout), bias: [C]
    Returns:
      w_t : [D, Cp]  param_dtype   (transposed, classes padded to lane-dense)
      b2d : [1, Cp]  float32       (bias is always added in f32 in the kernel)
      C   : original num_classes
    """
    C, D = weight.shape
    Cp = _round_up(C, 128)
    if Cp > tn_cap:
        Cp = _round_up(Cp, tn_cap)

    w_t = jnp.asarray(weight, dtype=param_dtype).T          # [D, C]
    b = jnp.asarray(bias, dtype=jnp.float32)
    if Cp != C:
        w_t = jnp.pad(w_t, ((0, 0), (0, Cp - C)))
        b = jnp.pad(b, (0, Cp - C))
    return w_t, b.reshape(1, Cp), C


def synergy_head(x, w_t, b2d, num_classes, *, tm_cap=256, tn_cap=512, tk_cap=512):
    """logits[:B, :num_classes] = x @ W.T + b using the pre-prepared params."""
    B, D = x.shape
    Dw, Cp = w_t.shape
    assert D == Dw, "in_dim mismatch"
    assert Cp % 128 == 0 and b2d.shape == (1, Cp)

    # Feed activations in the weight's (possibly reduced) precision so x HBM
    # traffic also shrinks; the kernel still accumulates in f32.
    if x.dtype != w_t.dtype:
        x = x.astype(w_t.dtype)

    # ---- tile sizes ------------------------------------------------------
    # classes (lane axis): multiple of 128 dividing Cp
    tn = min(Cp, tn_cap)
    assert Cp % tn == 0

    # batch (sublane axis): pad to x8; bigger tm => fewer weight re-streams
    Bp = _round_up(B, 8)
    if Bp <= tm_cap:
        tm = Bp
    else:
        tm = tm_cap
        Bp = _round_up(Bp, tm)
    if Bp != B:
        x = jnp.pad(x, ((0, Bp - B), (0, 0)))

    # in_dim (reduction axis): lane-aligned K tiles when possible, else one K step
    if D % 128 == 0 and D > tk_cap:
        tk = tk_cap
        while D % tk != 0:
            tk -= 128
    else:
        tk = D

    # v7x has 2 TensorCores: expose >=2 parallel blocks for tiny problems.
    if Bp // tm == 1 and Cp // tn == 1 and Cp % 256 == 0:
        tn = Cp // 2
    # TODO(synk): if the grid stays (1,1) (e.g. Cp == 128 as in the demo), fuse
    # the head into the preceding kernel instead of paying a standalone call.

    grid = (Bp // tm, Cp // tn, D // tk)
    gi, gj, _ = grid

    pbytes = jnp.dtype(x.dtype).itemsize
    obytes = 4
    cost = pl.CostEstimate(
        flops=2 * Bp * D * Cp,
        transcendentals=0,
        bytes_accessed=(
            Bp * D * pbytes * gj      # x re-read once per class tile
            + D * Cp * pbytes * gi    # weight re-read once per batch tile
            + Cp * 4 * gi             # bias re-read once per batch tile
            + Bp * Cp * obytes        # output written once
        ),
    )

    # Double-buffered tiles + f32 accumulator; capped at 48 MiB (v7x headroom).
    working = (
        2 * (tm * tk + tk * tn) * pbytes
        + 2 * (tm * tn + tn) * obytes
        + tm * tn * 4
    )
    vmem_limit = int(min(48 * 1024 * 1024, max(2 * working, 8 * 1024 * 1024)))

    out = pl.pallas_call(
        _synergy_head_kernel,
        out_shape=jax.ShapeDtypeStruct((Bp, Cp), jnp.float32),
        grid_spec=pltpu.PrefetchScalarGridSpec(
            num_scalar_prefetch=0,
            grid=grid,
            in_specs=[
                pl.BlockSpec((tm, tk), lambda i, j, k: (i, k)),   # activations
                pl.BlockSpec((tk, tn), lambda i, j, k: (k, j)),   # weight [D, Cp]
                pl.BlockSpec((1, tn), lambda i, j, k: (0, j)),    # bias (f32)
            ],
            out_specs=pl.BlockSpec((tm, tn), lambda i, j, k: (i, j)),
            scratch_shapes=[pltpu.VMEM((tm, tn), jnp.float32)],
        ),
        compiler_params=pltpu.CompilerParams(
            dimension_semantics=("parallel", "parallel", "arbitrary"),
            vmem_limit_bytes=vmem_limit,
        ),
        cost_estimate=cost,
    )(x, w_t, b2d)

    return out[:B, :num_classes]


if __name__ == "__main__":
    key = jax.random.PRNGKey(0)
    k_x, k_w, k_b = jax.random.split(key, 3)

    batch = 8
    in_dim = 32
    num_classes = 100

    # Deterministic synthetic inputs matching nn.Linear(in_dim, num_classes).
    x = jax.random.normal(k_x, (batch, in_dim), dtype=jnp.float32)
    bound = 1.0 / (in_dim ** 0.5)
    weight = jax.random.uniform(
        k_w, (num_classes, in_dim), minval=-bound, maxval=bound, dtype=jnp.float32
    )
    bias = jax.random.uniform(
        k_b, (num_classes,), minval=-bound, maxval=bound, dtype=jnp.float32
    )

    ref = x @ weight.T + bias

    # f32 path (exact vs reference)
    w_t, b2d, _ = prepare_synergy_head_params(weight, bias, param_dtype=jnp.float32)
    logits = jax.block_until_ready(synergy_head(x, w_t, b2d, num_classes))
    assert logits.shape == (batch, num_classes)
    assert jnp.allclose(logits, ref, atol=1e-5, rtol=1e-5)

    # bf16 weights/activations, f32 accumulate (bandwidth-optimized variant)
    w_t16, b2d16, _ = prepare_synergy_head_params(weight, bias, param_dtype=jnp.bfloat16)
    logits16 = jax.block_until_ready(synergy_head(x, w_t16, b2d16, num_classes))
    assert logits16.shape == (batch, num_classes)
    assert jnp.allclose(logits16, ref, atol=5e-2, rtol=5e-2)

    print("KERNEL_OK")
</pallas_src>

<mosaic_0001>
module attributes {stable_mosaic.version = 11 : i64} {
  func.func @_synergy_head_kernel(%arg0: i32, %arg1: i32, %arg2: i32, %arg3: memref<8x32xf32, #tpu.memory_space<vmem>>, %arg4: memref<32x128xf32, #tpu.memory_space<vmem>>, %arg5: memref<1x128xf32, #tpu.memory_space<vmem>>, %arg6: memref<8x128xf32, #tpu.memory_space<vmem>>, %arg7: memref<8x128xf32, #tpu.memory_space<vmem>>) attributes {dimension_semantics = [#tpu.dimension_semantics<parallel>, #tpu.dimension_semantics<parallel>, #tpu.dimension_semantics<arbitrary>], iteration_bounds = array<i64: 1, 1, 1>, scalar_prefetch = 0 : i64, scratch_operands = 1 : i64, tpu.core_type = #tpu.core_type<tc>, window_params = [{transform_indices = @transform_0, window_bounds = array<i64: 8, 32>}, {transform_indices = @transform_1, window_bounds = array<i64: 32, 128>}, {transform_indices = @transform_2, window_bounds = array<i64: 1, 128>}, {transform_indices = @transform_3, window_bounds = array<i64: 8, 128>}]} {
    %c0_i32 = arith.constant 0 : i32
    %0 = arith.cmpi eq, %arg2, %c0_i32 : i32
    %1 = arith.extui %0 : i1 to i32
    %c0_i32_0 = arith.constant 0 : i32
    %2 = arith.cmpi ne, %1, %c0_i32_0 : i32
    scf.if %2 {
      %cst_10 = arith.constant 0.000000e+00 : f32
      %12 = vector.broadcast %cst_10 : f32 to vector<8x128xf32>
      %c0_11 = arith.constant 0 : index
      %c0_12 = arith.constant 0 : index
      %13 = vector.load %arg7[%c0_11, %c0_12] : memref<8x128xf32, #tpu.memory_space<vmem>>, vector<8x128xf32>
      tpu.vector_store %arg7[%c0_11, %c0_12], %12 {strides = array<i32>} : memref<8x128xf32, #tpu.memory_space<vmem>>, vector<8x128xf32>,
    } else {
    }
    %c0 = arith.constant 0 : index
    %c0_1 = arith.constant 0 : index
    %3 = vector.load %arg7[%c0, %c0_1] : memref<8x128xf32, #tpu.memory_space<vmem>>, vector<8x128xf32>
    %c0_2 = arith.constant 0 : index
    %c0_3 = arith.constant 0 : index
    %4 = vector.load %arg3[%c0_2, %c0_3] : memref<8x32xf32, #tpu.memory_space<vmem>>, vector<8x32xf32>
    %c0_4 = arith.constant 0 : index
    %c0_5 = arith.constant 0 : index
    %5 = vector.load %arg4[%c0_4, %c0_5] : memref<32x128xf32, #tpu.memory_space<vmem>>, vector<32x128xf32>
    %cst = arith.constant dense<0.000000e+00> : vector<8x128xf32>
    %6 = tpu.matmul %4, %5, %cst {dimension_numbers = #tpu.dot_dimension_numbers<[1], [0], [0], [1], [0, 0, 1, 1], [], []>} : vector<8x32xf32>, vector<32x128xf32>, vector<8x128xf32> -> vector<8x128xf32>
    %7 = arith.addf %3, %6 : vector<8x128xf32>
    %c0_6 = arith.constant 0 : index
    %c0_7 = arith.constant 0 : index
    %8 = vector.load %arg7[%c0_6, %c0_7] : memref<8x128xf32, #tpu.memory_space<vmem>>, vector<8x128xf32>
    tpu.vector_store %arg7[%c0_6, %c0_7], %7 {strides = array<i32>} : memref<8x128xf32, #tpu.memory_space<vmem>>, vector<8x128xf32>,
    %c0_i32_8 = arith.constant 0 : i32
    %9 = arith.cmpi eq, %arg2, %c0_i32_8 : i32
    %10 = arith.extui %9 : i1 to i32
    %c0_i32_9 = arith.constant 0 : i32
    %11 = arith.cmpi ne, %10, %c0_i32_9 : i32
    scf.if %11 {
      %c0_10 = arith.constant 0 : index
      %c0_11 = arith.constant 0 : index
      %12 = vector.load %arg7[%c0_10, %c0_11] : memref<8x128xf32, #tpu.memory_space<vmem>>, vector<8x128xf32>
      %c0_12 = arith.constant 0 : index
      %c0_13 = arith.constant 0 : index
      %13 = vector.load %arg5[%c0_12, %c0_13] : memref<1x128xf32, #tpu.memory_space<vmem>>, vector<1x128xf32>
      %14 = vector.broadcast %13 : vector<1x128xf32> to vector<8x128xf32>
      %15 = arith.addf %12, %14 : vector<8x128xf32>
      %c0_14 = arith.constant 0 : index
      %c0_15 = arith.constant 0 : index
      %16 = vector.load %arg6[%c0_14, %c0_15] : memref<8x128xf32, #tpu.memory_space<vmem>>, vector<8x128xf32>
      tpu.vector_store %arg6[%c0_14, %c0_15], %15 {strides = array<i32>} : memref<8x128xf32, #tpu.memory_space<vmem>>, vector<8x128xf32>,
    } else {
    }
    return
  }
  func.func @transform_0(%arg0: i32, %arg1: i32, %arg2: i32) -> (i32, i32) {
    %c0_i32 = arith.constant 0 : i32
    return %arg0, %arg2 : i32, i32
  }
  func.func @transform_1(%arg0: i32, %arg1: i32, %arg2: i32) -> (i32, i32) {
    %c0_i32 = arith.constant 0 : i32
    return %arg2, %arg1 : i32, i32
  }
  func.func @transform_2(%arg0: i32, %arg1: i32, %arg2: i32) -> (i32, i32) {
    %c0_i32 = arith.constant 0 : i32
    %c0_i32_0 = arith.constant 0 : i32
    return %c0_i32, %arg1 : i32, i32
  }
  func.func @transform_3(%arg0: i32, %arg1: i32, %arg2: i32) -> (i32, i32) {
    %c0_i32 = arith.constant 0 : i32
    return %arg0, %arg1 : i32, i32
  }
}

</mosaic_0001>

<llo_original>
// kernel: tpu_custom_call.1
$region0: #{tpu_custom_call.1}
  #allocation0 [shape = 'u32[]', space=smem, size = 0x4, offset = 0x4, fixed_abs, tag = 'smem constant byte address 0x4 - core index']
  #allocation1 [shape = 'u32[72,128]{1,0:T(1,128)}', space=vmem, size = 0x9000, scoped, tag = 'internal scratch']
  #allocation2 [shape = 'f32[8,128]{1,0:T(8,128)}', space=vmem, size = 0x1000, scoped, tag = 'scratch operand']
  %s0 = inlined_call_operand.hbm [shape: f32[8,32], index: 0, kind: input, shape index: {}]
  %s1 = inlined_call_operand.hbm [shape: f32[32,128], index: 1, kind: input, shape index: {}]
  %s2 = inlined_call_operand.vmem [shape: f32[1,128], index: 2, kind: input, shape index: {}]
  %s3 = inlined_call_operand.hbm [shape: f32[8,128], index: 3, kind: output, shape index: {}]
  %s4 = sld [smem:[#allocation0]]
  $region38: #{tpu_custom_call.1} parent=0
    _
  %s6 = ssub.s32 1, %s4
  %s7 = scalar_select 0, %s6, %s4
  $region1: #{tpu_custom_call.1} parent=0
    #allocation3 [shape = 'u8[4096]{0}', space=vmem, size = 0x1000, scoped, tag = 'input window, operand 0, single buffered']
    #allocation4 [shape = 's32[1]{0}', space=sflag, size = 0x4, scoped, tag = 'scoped memory for tpu_custom_call.1']
    #allocation5 [shape = 's32[1]{0}', space=sflag, size = 0x4, scoped, tag = 'scoped memory for tpu_custom_call.1']
    #allocation6 [shape = 'u8[16384]{0}', space=vmem, size = 0x4000, scoped, tag = 'input window, operand 1, single buffered']
    #allocation7 [shape = 's32[1]{0}', space=sflag, size = 0x4, scoped, tag = 'scoped memory for tpu_custom_call.1']
    #allocation8 [shape = 'u8[4096]{0}', space=vmem, size = 0x1000, scoped, tag = 'output window, operand 0, single buffered']
    %8 = vsyncpa [#allocation4], 0
    %9 = vsyncpa [#allocation7], 0
    %10 = vsyncpa [#allocation5], 0
    // Predicated region
    $region2: #{tpu_custom_call.1} parent=1 // pred_check
      _
    $region3: #{tpu_custom_call.1} parent=1 // pred_check_branch
      %12 = sbr.rel (0) target = $region5
    $region4: #{tpu_custom_call.1} parent=1 // pred_region
      %14 = vsyncadd [#allocation4], 0
      %s16 = sshll.u32 %s0, 4
      %s17 = int_to_ptr.hbm [resolvable:$true] %s16
      %s18 = sshll.u32 [#allocation3], 4
      %s19 = int_to_ptr.vmem [resolvable:$true] %s18
      %21 = dma.hbm_to_vmem [thread:$0]  %s17, 128, %s19, [#allocation4]
    $region5: #{tpu_custom_call.1} parent=1 // pred_fallthru
      _
    // Predicated region
    $region6: #{tpu_custom_call.1} parent=1 // pred_check
      _
    $region7: #{tpu_custom_call.1} parent=1 // pred_check_branch
      %23 = sbr.rel (0) target = $region9
    $region8: #{tpu_custom_call.1} parent=1 // pred_region
      %25 = vsyncadd [#allocation7], 0
      %s26 = sshll.u32 %s1, 4
      %s27 = int_to_ptr.hbm [resolvable:$true] %s26
      %s28 = sshll.u32 [#allocation6], 4
      %s29 = int_to_ptr.vmem [resolvable:$true] %s28
      %34 = dma.hbm_to_vmem [thread:$0]  %s27, 512, %s29, [#allocation7], 128, 128, 8
    $region9: #{tpu_custom_call.1} parent=1 // pred_fallthru
      _
    // Predicated region
    $region10: #{tpu_custom_call.1} parent=1 // pred_check
      _
    $region11: #{tpu_custom_call.1} parent=1 // pred_check_branch
      %36 = sbr.rel (0) target = $region13
    $region12: #{tpu_custom_call.1} parent=1 // pred_region
      _
    $region13: #{tpu_custom_call.1} parent=1 // pred_fallthru
      _
    // Predicated region
    $region14: #{tpu_custom_call.1} parent=1 // pred_check
      _
    $region15: #{tpu_custom_call.1} parent=1 // pred_check_branch
      %38 = sbr.rel (0) target = $region17
    $region16: #{tpu_custom_call.1} parent=1 // pred_region
      %40 = dma.done [#allocation4], 128
    $region17: #{tpu_custom_call.1} parent=1 // pred_fallthru
      _
    // Predicated region
    $region18: #{tpu_custom_call.1} parent=1 // pred_check
      _
    $region19: #{tpu_custom_call.1} parent=1 // pred_check_branch
      %42 = sbr.rel (0) target = $region21
    $region20: #{tpu_custom_call.1} parent=1 // pred_region
      %44 = dma.done [#allocation7], 512
    $region21: #{tpu_custom_call.1} parent=1 // pred_fallthru
      _
    %p45 = scmp.eq.s32.totalorder 0, 0
    // Predicated region
    $region22: #{tpu_custom_call.1} parent=1 // pred_check
      %p46 = pneg %p45
    $region23: #{tpu_custom_call.1} parent=1 // pred_check_branch
      %48 = sbr.rel (%p46) target = $region25
    $region24: #{tpu_custom_call.1} parent=1 // pred_region
      %49 = vst [vmem:[#allocation2] sm:$0xff] 0.0
    $region25: #{tpu_custom_call.1} parent=1 // pred_fallthru
      _
    %v50 = vld [vmem:[#allocation2] sm:$0xff]
    %v51 = vld [vmem:[#allocation3] sm:$0xff]
    %v52 = vld [vmem:[#allocation6] sm:$0xff]
    %v53 = vld [vmem:[#allocation6 + $0x8] sm:$0xff]
    %v54 = vld [vmem:[#allocation6 + $0x10] sm:$0xff]
    %v55 = vld [vmem:[#allocation6 + $0x18] sm:$0xff]
    %vm56 = vcmask 261120
    %v58 = vsel %vm56, %v51, 0
    %60 = vmatpush.msra.mxu0 0.0
    %61 = vmatpush.msra.mxu0 0.0
    %62 = vmatpush.msra.mxu0 0.0
    %63 = vmatpush.msra.mxu0 0.0
    %64 = vmatpush.msra.mxu0 0.0
    %65 = vmatpush.msra.mxu0 0.0
    %66 = vmatpush.msra.mxu0 0.0
    %67 = vmatpush.msra.mxu0 0.0
    %68 = vmatpush.msra.mxu0 0.0
    %69 = vmatpush.msra.mxu0 0.0
    %70 = vmatpush.msra.mxu0 0.0
    %71 = vmatpush.msra.mxu0 0.0
    %72 = vmatpush.msra.mxu0 %v55
    %73 = vmatpush.msra.mxu0 %v54
    %74 = vmatpush.msra.mxu0 %v53
    %75 = vmatpush.msra.mxu0 %v52
    %76 = vmatmul.f32.gmra.mxu0 %v58
    %v77 = vpop.f32.mrf.mxu0
    %v78 = vadd.f32 0.0, %v77
    %79 = vdwg.mxu0
    %v80 = vadd.f32 %v50, %v78
    %81 = vst [vmem:[#allocation2] sm:$0xff] %v80
    // Predicated region
    $region26: #{tpu_custom_call.1} parent=1 // pred_check
      %p82 = pneg %p45
    $region27: #{tpu_custom_call.1} parent=1 // pred_check_branch
      %84 = sbr.rel (%p82) target = $region29
    $region28: #{tpu_custom_call.1} parent=1 // pred_region
      %v85 = vld [vmem:[#allocation2] sm:$0xff]
      %v86 = vld [vmem:[%s2] sm:$0x1]
      %v88 = vperm.slane %v86, 0
      %v90 = vadd.f32 %v85, %v88
      %91 = vst [vmem:[#allocation8] sm:$0xff] %v90
    $region29: #{tpu_custom_call.1} parent=1 // pred_fallthru
      _
    // Predicated region
    $region30: #{tpu_custom_call.1} parent=1 // pred_check
      _
    $region31: #{tpu_custom_call.1} parent=1 // pred_check_branch
      %93 = sbr.rel (0) target = $region33
    $region32: #{tpu_custom_call.1} parent=1 // pred_region
      %95 = vsyncadd [#allocation5], 0
      %s97 = sshll.u32 [#allocation8], 4
      %s98 = int_to_ptr.vmem [resolvable:$true] %s97
      %s99 = sshll.u32 %s3, 4
      %s100 = int_to_ptr.hbm [resolvable:$true] %s99
      %102 = dma.vmem_to_hbm [thread:$0]  %s98, 128, %s100, [#allocation5]
    $region33: #{tpu_custom_call.1} parent=1 // pred_fallthru
      _
    // Predicated region
    $region34: #{tpu_custom_call.1} parent=1 // pred_check
      _
    $region35: #{tpu_custom_call.1} parent=1 // pred_check_branch
      %104 = sbr.rel (0) target = $region37
    $region36: #{tpu_custom_call.1} parent=1 // pred_region
      %106 = dma.done [#allocation5], 128
    $region37: #{tpu_custom_call.1} parent=1 // pred_fallthru
      _
    %107 = vsyncpa [#allocation4], 1
    %108 = vsyncpa [#allocation7], 1
    %109 = vsyncpa [#allocation5], 1

</llo_original>
